<compile_context>
chip_gen: v5e
topology: v5e:2x2
jax: 0.10.0
libtpu: 0.0.40
codegen_flags: <defaults>
</compile_context>

<pallas_src>
import functools

import jax
import jax.numpy as jnp
from jax.experimental import pallas as pl
from jax.experimental.pallas import tpu as pltpu


# ----------------------------------------------------------------------------- kernels

def _uvf_kernel(q_ref, uv_ref, f2_ref, out_ref, *, hw2, hh2):
    """out = ||q||_2(dim=C) / || [half_w*u, half_h*v, ave_focal] ||_2(dim=C)."""
    q = q_ref[...]                                   # (B, 3, TN)
    uv = uv_ref[...]                                 # (B, 2, TN)
    f2 = f2_ref[...]                                 # (B, 1) = ave_focal**2

    q0 = q[:, 0, :]
    q1 = q[:, 1, :]
    q2 = q[:, 2, :]
    abs2 = q0 * q0 + q1 * q1 + q2 * q2               # (B, TN)

    u = uv[:, 0, :]
    v = uv[:, 1, :]
    proj2 = u * u * hw2 + v * v * hh2 + f2           # (B, TN), lane-broadcast of f2

    # exact divide: full f32 precision, cost hidden under the DMA stream
    out_ref[...] = jnp.sqrt(abs2 / proj2)


def _uvf_packed_kernel(p_ref, f2_ref, out_ref, *, hw2, hh2):
    """Same math, single packed (B, 5, TN) input: rows 0..2 = xyz, 3..4 = uv."""
    p = p_ref[...]                                   # (B, 5, TN)
    f2 = f2_ref[...]                                 # (B, 1)

    q0 = p[:, 0, :]
    q1 = p[:, 1, :]
    q2 = p[:, 2, :]
    u = p[:, 3, :]
    v = p[:, 4, :]

    abs2 = q0 * q0 + q1 * q1 + q2 * q2
    proj2 = u * u * hw2 + v * v * hh2 + f2
    out_ref[...] = jnp.sqrt(abs2 / proj2)


def _minmax_kernel(q_ref, out_ref, *, rdist_min, inv_range):
    """out = (||q||_2(dim=C) - rdist_min) / (rdist_max - rdist_min)."""
    q = q_ref[...]                                   # (B, 3, TN)
    q0 = q[:, 0, :]
    q1 = q[:, 1, :]
    q2 = q[:, 2, :]
    abs_d = jnp.sqrt(q0 * q0 + q1 * q1 + q2 * q2)    # (B, TN)
    out_ref[...] = (abs_d - rdist_min) * inv_range


# ----------------------------------------------------------------------------- helpers

_VMEM_BUDGET = 24 * 1024 * 1024          # conservative on v7x (64 MiB physical VMEM)


def _round_up(x, m):
    return ((x + m - 1) // m) * m


def _block_bytes_per_lane(B, in_chans):
    """f32 bytes per lane column for ONE buffer, with (8,128) sublane padding:
    each (B, C, tn) input block + the (B, tn) output block."""
    b = 0
    for c in in_chans:
        b += B * _round_up(c, 8) * 4                 # input blocks: C pads to 8
    b += _round_up(B, 8) * 4                         # output block: B pads to 8
    return b


def _pick_tile(N, bytes_per_lane, *, tile_n, budget=_VMEM_BUDGET):
    """Largest lane tile (multiple of 128, or full N) whose double-buffered,
    sublane-padded f32 working set fits `budget`, while keeping >= 2 grid
    steps whenever N allows it (so v7x's 2 TensorCores both get work)."""
    if N <= 128:
        return N                                     # full-extent lane block
    t = min(tile_n, N)
    if N >= 256:
        t = min(t, _round_up(pl.cdiv(N, 2), 128))    # force >= 2 parallel steps
    t = max(128, (t // 128) * 128)
    per_lane = 2 * bytes_per_lane                    # double-buffered
    while t > 128 and t * per_lane > budget:
        t = max(128, ((t // 2) // 128) * 128)
    return t


def _vmem_limit(tn, bytes_per_lane, extra_bytes=16 * 1024):
    """Explicit scoped-VMEM limit: padded double-buffered working set + headroom."""
    need = 2 * bytes_per_lane * tn + extra_bytes
    return int(min(max(need + (4 << 20), 16 << 20), 56 << 20))


def _ave_focal_sq(calibs, B):
    ave_focal = (calibs[:, 0, 0] + calibs[:, 1, 1]) * 0.5
    return jnp.square(ave_focal).astype(jnp.float32).reshape(B, 1)


# ----------------------------------------------------------------------------- wrappers

def ray_distance_normalize_uvf(queries, norm_uv, calibs, *, half_w, half_h,
                               tile_n=16384):
    """Drop-in path: queries [B,3,N], norm_uv [B,2,N], calibs [B,4,4] -> [B,1,N]."""
    B, C, N = queries.shape
    bpl = _block_bytes_per_lane(B, (C, 2))
    tn = _pick_tile(N, bpl, tile_n=tile_n)
    grid_n = pl.cdiv(N, tn)

    f2 = _ave_focal_sq(calibs, B)
    kernel = functools.partial(_uvf_kernel,
                               hw2=float(half_w) * float(half_w),
                               hh2=float(half_h) * float(half_h))
    out2d = pl.pallas_call(
        kernel,
        out_shape=jax.ShapeDtypeStruct((B, N), jnp.float32),
        grid=(grid_n,),
        in_specs=[
            pl.BlockSpec((B, C, tn), lambda n: (0, 0, n)),
            pl.BlockSpec((B, 2, tn), lambda n: (0, 0, n)),
            pl.BlockSpec((B, 1), lambda n: (0, 0)),
        ],
        out_specs=pl.BlockSpec((B, tn), lambda n: (0, n)),
        compiler_params=pltpu.CompilerParams(
            dimension_semantics=("parallel",),
            vmem_limit_bytes=_vmem_limit(tn, bpl)),
    )(queries, norm_uv, f2)
    return out2d[:, None, :]                         # (B, 1, N), free reshape


def ray_distance_normalize_uvf_packed(q_uv, calibs, *, half_w, half_h,
                                      tile_n=16384):
    """Preferred fast path: q_uv [B,5,N] (rows 0..2 = query xyz, 3..4 = norm_uv).
    One 8-sublane-padded read tile instead of two -> ~2x fewer HBM bytes.
    The producer should emit this layout directly (do not concat in a wrapper)."""
    B, C5, N = q_uv.shape
    bpl = _block_bytes_per_lane(B, (C5,))
    tn = _pick_tile(N, bpl, tile_n=tile_n)
    grid_n = pl.cdiv(N, tn)

    f2 = _ave_focal_sq(calibs, B)
    kernel = functools.partial(_uvf_packed_kernel,
                               hw2=float(half_w) * float(half_w),
                               hh2=float(half_h) * float(half_h))
    out2d = pl.pallas_call(
        kernel,
        out_shape=jax.ShapeDtypeStruct((B, N), jnp.float32),
        grid=(grid_n,),
        in_specs=[
            pl.BlockSpec((B, C5, tn), lambda n: (0, 0, n)),
            pl.BlockSpec((B, 1), lambda n: (0, 0)),
        ],
        out_specs=pl.BlockSpec((B, tn), lambda n: (0, n)),
        compiler_params=pltpu.CompilerParams(
            dimension_semantics=("parallel",),
            vmem_limit_bytes=_vmem_limit(tn, bpl)),
    )(q_uv, f2)
    return out2d[:, None, :]


def ray_distance_normalize_minmax(queries, *, rdist_min, rdist_max, tile_n=16384):
    """queries: [B, 3, N] f32 -> [B, 1, N] f32."""
    B, C, N = queries.shape
    bpl = _block_bytes_per_lane(B, (C,))
    tn = _pick_tile(N, bpl, tile_n=tile_n)
    grid_n = pl.cdiv(N, tn)

    kernel = functools.partial(
        _minmax_kernel,
        rdist_min=float(rdist_min),
        inv_range=float(1.0 / (rdist_max - rdist_min)),
    )
    out2d = pl.pallas_call(
        kernel,
        out_shape=jax.ShapeDtypeStruct((B, N), jnp.float32),
        grid=(grid_n,),
        in_specs=[pl.BlockSpec((B, C, tn), lambda n: (0, 0, n))],
        out_specs=pl.BlockSpec((B, tn), lambda n: (0, n)),
        compiler_params=pltpu.CompilerParams(
            dimension_semantics=("parallel",),
            vmem_limit_bytes=_vmem_limit(tn, bpl)),
    )(queries)
    return out2d[:, None, :]


# ----------------------------------------------------------------------------- demo / check

if __name__ == "__main__":
    # synthetic "opt" configuration (deterministic, in-script)
    img_size = (512, 384)            # -> half_w = 256, half_h = 192
    half_w, half_h = img_size[0] // 2, img_size[1] // 2
    wks_z_shift = 10.0
    wks_size = (2.0, 2.0, 2.0)
    bx, by, bz = wks_size[0] / 2, wks_size[1] / 2, wks_size[2] / 2
    rdist_min = -bz + wks_z_shift
    rdist_max = float(jnp.linalg.norm(
        jnp.array([bx, by, bz + wks_z_shift], jnp.float32)))

    B, N = 2, 1024
    key = jax.random.PRNGKey(0)
    k_q, k_uv, k_f = jax.random.split(key, 3)

    queries = jax.random.normal(k_q, (B, 3, N), dtype=jnp.float32) * 2.0 + 5.0
    norm_uv = jax.random.uniform(k_uv, (B, 2, N), dtype=jnp.float32,
                                 minval=-1.0, maxval=1.0)
    transforms = jnp.zeros((B, 2, 3), dtype=jnp.float32)   # values never read (PyTorch uses zeros_like only)
    calibs = jnp.tile(jnp.eye(4, dtype=jnp.float32)[None], (B, 1, 1))
    focals = jax.random.uniform(k_f, (B,), dtype=jnp.float32,
                                minval=400.0, maxval=600.0)
    calibs = calibs.at[:, 0, 0].set(focals).at[:, 1, 1].set(focals * 1.05)

    # packed layout, as a producer would emit it (rows 0..2 xyz, rows 3..4 uv)
    q_uv_packed = jnp.concatenate([queries, norm_uv], axis=1)       # (B, 5, N)

    # --- Pallas kernels ---
    out_uvf = ray_distance_normalize_uvf(queries, norm_uv, calibs,
                                         half_w=half_w, half_h=half_h)
    out_uvf_small = ray_distance_normalize_uvf(queries, norm_uv, calibs,
                                               half_w=half_w, half_h=half_h,
                                               tile_n=256)           # multi-step path
    out_uvf_packed = ray_distance_normalize_uvf_packed(q_uv_packed, calibs,
                                                       half_w=half_w, half_h=half_h)
    out_minmax = ray_distance_normalize_minmax(queries, rdist_min=rdist_min,
                                               rdist_max=rdist_max)

    # unaligned-N tail check (partial last tile, masked writeback)
    N2 = 1000
    queries2 = queries[:, :, :N2]
    out_minmax_tail = ray_distance_normalize_minmax(queries2, rdist_min=rdist_min,
                                                    rdist_max=rdist_max)
    jax.block_until_ready((out_uvf, out_uvf_small, out_uvf_packed,
                           out_minmax, out_minmax_tail))

    # --- pure-JAX references (mirror the PyTorch forward) ---
    abs_dist_ray = jnp.linalg.norm(queries, axis=1, keepdims=True)          # [B, 1, N]
    uv = jnp.stack([norm_uv[:, 0, :] * half_w, norm_uv[:, 1, :] * half_h], axis=1)
    ave_focal = (calibs[:, 0, 0] + calibs[:, 1, 1]) / 2.0
    ave_focal = jnp.broadcast_to(ave_focal[:, None, None], (B, 1, N))
    proj_uvf = jnp.concatenate([uv, ave_focal], axis=1)                     # [B, 3, N]
    proj_dist_ray = jnp.linalg.norm(proj_uvf, axis=1, keepdims=True)
    ref_uvf = abs_dist_ray / proj_dist_ray
    ref_minmax = (abs_dist_ray - rdist_min) / (rdist_max - rdist_min)

    assert out_uvf.shape == (B, 1, N) and out_minmax.shape == (B, 1, N)
    assert out_minmax_tail.shape == (B, 1, N2)
    assert jnp.allclose(out_uvf, ref_uvf, rtol=1e-5, atol=1e-6), "uvf mismatch"
    assert jnp.allclose(out_uvf_small, ref_uvf, rtol=1e-5, atol=1e-6), "uvf small-tile mismatch"
    assert jnp.allclose(out_uvf_packed, ref_uvf, rtol=1e-5, atol=1e-6), "uvf packed mismatch"
    assert jnp.allclose(out_minmax, ref_minmax, rtol=1e-5, atol=1e-6), "minmax mismatch"
    assert jnp.allclose(out_minmax_tail, ref_minmax[:, :, :N2],
                        rtol=1e-5, atol=1e-6), "minmax tail mismatch"

    print("KERNEL_OK")
</pallas_src>

<mosaic_0001>
module attributes {stable_mosaic.version = 11 : i64} {
  func.func @_uvf_kernel(%arg0: i32, %arg1: memref<2x3x512xf32, #tpu.memory_space<vmem>>, %arg2: memref<2x2x512xf32, #tpu.memory_space<vmem>>, %arg3: memref<2x1xf32, #tpu.memory_space<vmem>>, %arg4: memref<2x512xf32, #tpu.memory_space<vmem>>) attributes {dimension_semantics = [#tpu.dimension_semantics<parallel>], iteration_bounds = array<i64: 2>, scalar_prefetch = 0 : i64, scratch_operands = 0 : i64, tpu.core_type = #tpu.core_type<tc>, window_params = [{transform_indices = @transform_0, window_bounds = array<i64: 2, 3, 512>}, {transform_indices = @transform_1, window_bounds = array<i64: 2, 2, 512>}, {pipeline_mode = #tpu.pipeline_mode<synchronous>, transform_indices = @transform_2, window_bounds = array<i64: 2, 1>}, {transform_indices = @transform_3, window_bounds = array<i64: 2, 512>}]} {
    %c0 = arith.constant 0 : index
    %c0_0 = arith.constant 0 : index
    %c0_1 = arith.constant 0 : index
    %0 = vector.load %arg1[%c0, %c0_0, %c0_1] : memref<2x3x512xf32, #tpu.memory_space<vmem>>, vector<2x3x512xf32>
    %c0_2 = arith.constant 0 : index
    %c0_3 = arith.constant 0 : index
    %c0_4 = arith.constant 0 : index
    %1 = vector.load %arg2[%c0_2, %c0_3, %c0_4] : memref<2x2x512xf32, #tpu.memory_space<vmem>>, vector<2x2x512xf32>
    %c0_5 = arith.constant 0 : index
    %c0_6 = arith.constant 0 : index
    %2 = vector.load %arg3[%c0_5, %c0_6] : memref<2x1xf32, #tpu.memory_space<vmem>>, vector<2x1xf32>
    %3 = vector.extract_strided_slice %0 {offsets = [0, 0, 0], sizes = [2, 1, 512], strides = [1, 1, 1]} : vector<2x3x512xf32> to vector<2x1x512xf32>
    %4 = vector.shape_cast %3 : vector<2x1x512xf32> to vector<2x512xf32>
    %5 = vector.extract_strided_slice %0 {offsets = [0, 1, 0], sizes = [2, 1, 512], strides = [1, 1, 1]} : vector<2x3x512xf32> to vector<2x1x512xf32>
    %6 = vector.shape_cast %5 : vector<2x1x512xf32> to vector<2x512xf32>
    %7 = vector.extract_strided_slice %0 {offsets = [0, 2, 0], sizes = [2, 1, 512], strides = [1, 1, 1]} : vector<2x3x512xf32> to vector<2x1x512xf32>
    %8 = vector.shape_cast %7 : vector<2x1x512xf32> to vector<2x512xf32>
    %9 = arith.mulf %4, %4 : vector<2x512xf32>
    %10 = arith.mulf %6, %6 : vector<2x512xf32>
    %11 = arith.addf %9, %10 : vector<2x512xf32>
    %12 = arith.mulf %8, %8 : vector<2x512xf32>
    %13 = arith.addf %11, %12 : vector<2x512xf32>
    %14 = vector.extract_strided_slice %1 {offsets = [0, 0, 0], sizes = [2, 1, 512], strides = [1, 1, 1]} : vector<2x2x512xf32> to vector<2x1x512xf32>
    %15 = vector.shape_cast %14 : vector<2x1x512xf32> to vector<2x512xf32>
    %16 = vector.extract_strided_slice %1 {offsets = [0, 1, 0], sizes = [2, 1, 512], strides = [1, 1, 1]} : vector<2x2x512xf32> to vector<2x1x512xf32>
    %17 = vector.shape_cast %16 : vector<2x1x512xf32> to vector<2x512xf32>
    %18 = arith.mulf %15, %15 : vector<2x512xf32>
    %cst = arith.constant 6.553600e+04 : f32
    %19 = vector.broadcast %cst : f32 to vector<2x512xf32>
    %20 = arith.mulf %18, %19 : vector<2x512xf32>
    %21 = arith.mulf %17, %17 : vector<2x512xf32>
    %cst_7 = arith.constant 3.686400e+04 : f32
    %22 = vector.broadcast %cst_7 : f32 to vector<2x512xf32>
    %23 = arith.mulf %21, %22 : vector<2x512xf32>
    %24 = arith.addf %20, %23 : vector<2x512xf32>
    %25 = vector.broadcast %2 : vector<2x1xf32> to vector<2x512xf32>
    %26 = arith.addf %24, %25 : vector<2x512xf32>
    %27 = arith.divf %13, %26 : vector<2x512xf32>
    %28 = math.sqrt %27 : vector<2x512xf32>
    %c0_8 = arith.constant 0 : index
    %c0_9 = arith.constant 0 : index
    %29 = vector.load %arg4[%c0_8, %c0_9] : memref<2x512xf32, #tpu.memory_space<vmem>>, vector<2x512xf32>
    tpu.vector_store %arg4[%c0_8, %c0_9], %28 {strides = array<i32>} : memref<2x512xf32, #tpu.memory_space<vmem>>, vector<2x512xf32>,
    return
  }
  func.func @transform_0(%arg0: i32) -> (i32, i32, i32) {
    %c0_i32 = arith.constant 0 : i32
    %c0_i32_0 = arith.constant 0 : i32
    %c0_i32_1 = arith.constant 0 : i32
    return %c0_i32, %c0_i32_0, %arg0 : i32, i32, i32
  }
  func.func @transform_1(%arg0: i32) -> (i32, i32, i32) {
    %c0_i32 = arith.constant 0 : i32
    %c0_i32_0 = arith.constant 0 : i32
    %c0_i32_1 = arith.constant 0 : i32
    return %c0_i32, %c0_i32_0, %arg0 : i32, i32, i32
  }
  func.func @transform_2(%arg0: i32) -> (i32, i32) {
    %c0_i32 = arith.constant 0 : i32
    %c0_i32_0 = arith.constant 0 : i32
    %c0_i32_1 = arith.constant 0 : i32
    return %c0_i32, %c0_i32_0 : i32, i32
  }
  func.func @transform_3(%arg0: i32) -> (i32, i32) {
    %c0_i32 = arith.constant 0 : i32
    %c0_i32_0 = arith.constant 0 : i32
    return %c0_i32, %arg0 : i32, i32
  }
}

</mosaic_0001>

<llo_original>
// kernel: tpu_custom_call.1
$region0: #{tpu_custom_call.1}
  #allocation0 [shape = 'u32[]', space=smem, size = 0x4, offset = 0x4, fixed_abs, tag = 'smem constant byte address 0x4 - core index']
  #allocation1 [shape = 'u32[72,128]{1,0:T(1,128)}', space=vmem, size = 0x9000, scoped, tag = 'internal scratch']
  %s0 = inlined_call_operand.vmem [shape: f32[2,3,1024], index: 0, kind: input, shape index: {}]
  %s1 = inlined_call_operand.vmem [shape: f32[2,2,1024], index: 1, kind: input, shape index: {}]
  %s2 = inlined_call_operand.vmem [shape: f32[2,1], index: 2, kind: input, shape index: {}]
  %s3 = inlined_call_operand.hbm [shape: f32[2,1024], index: 3, kind: output, shape index: {}]
  %s4 = sld [smem:[#allocation0]]
  $region106: #{tpu_custom_call.1} parent=0
    _
  %s6 = ssub.s32 1, %s4
  %s7 = scalar_select 0, %s6, %s4
  $region1: #{tpu_custom_call.1} parent=0
    #allocation2 [shape = 'u8[32768]{0}', space=vmem, size = 0x8000, scoped, tag = 'input window, operand 0']
    #allocation3 [shape = 'u8[16384]{0}', space=vmem, size = 0x4000, scoped, tag = 'input window, operand 1']
    #allocation4 [shape = 'u8[8192]{0}', space=vmem, size = 0x2000, scoped, tag = 'output window, operand 0']
    #allocation5 [shape = 's32[2]{0}', space=sflag, size = 0x8, scoped, tag = 'scoped memory for tpu_custom_call.1']
    %8 = vsyncpa [#allocation5], 0
    %s9 = scalar_lea.sflag [#allocation5], 1
    %10 = vsyncpa %s9, 0
    loop: start=0, step=1, limit=4
    $region2: #{tpu_custom_call.1} parent=1 // loop_pre_header
      _
    $region3: #{tpu_custom_call.1} parent=1 // loop_header
      %s12 = sphi 0, %s16
      %p13 = scmp.ge.s32.totalorder %s12, 4
      %s22 = sphi 0, %s24
      %s25 = sphi 0, %s22
      %s26 = sphi 0, %s25
      %s42 = sphi 0, %s26
      %s48 = sphi 0, %s50
      %s51 = sphi 0, %s48
      %s52 = sphi 0, %s51
      %s68 = sphi 0, %s52
      %s72 = sphi 0, %s72
      %s74 = sphi 0, %s72
      %s75 = sphi 0, %s74
      %s89 = sphi 0, %s75
      %s95 = sphi 0, %s97
      %s98 = sphi 0, %s95
      %s99 = sphi 0, %s98
      %s115 = sphi 0, %s99
    $region4: #{tpu_custom_call.1} parent=1 // loop_header_branch
      %15 = sbr.rel (%p13) target = $region8
    $region5: #{tpu_custom_call.1} parent=1 // loop_body
      %s17 = ssub.s32 %s12, 1
      %s18 = ssub.s32 %s12, 2
      %s19 = sadd.s32 %s12, 1
      %s20 = ssub.s32 %s12, %s19
      %p21 = scmp.eq.s32.totalorder %s20, 0
      %s23 = sadd.s32 %s22, 1
      %s24 = scalar_select %p21, %s22, %s23
      %p27 = pneg %p21
      %p28 = scmp.eq.s32.totalorder %s12, 1
      %p29 = por %p27, %p28
      %p30 = scmp.ne.s32.totalorder %s22, %s25
      %p31 = scmp.eq.s32.totalorder %s12, 0
      %p32 = por %p30, %p31
      %p33 = scmp.ne.s32.totalorder %s22, %s25
      %p34 = scmp.eq.s32.totalorder %s17, 1
      %p35 = por %p33, %p34
      %p36 = scmp.ne.s32.totalorder %s25, %s26
      %p37 = scmp.eq.s32.totalorder %s17, 0
      %p38 = por %p36, %p37
      %p39 = scmp.ne.s32.totalorder %s25, %s26
      %p40 = scmp.eq.s32.totalorder %s18, 1
      %p41 = por %p39, %p40
      %p43 = scmp.ne.s32.totalorder %s26, %s42
      %p44 = scmp.eq.s32.totalorder %s18, 0
      %p45 = por %p43, %p44
      %s46 = ssub.s32 %s12, %s19
      %p47 = scmp.eq.s32.totalorder %s46, 0
      %s49 = sadd.s32 %s48, 1
      %s50 = scalar_select %p47, %s48, %s49
      %p53 = pneg %p47
      %p54 = scmp.eq.s32.totalorder %s12, 1
      %p55 = por %p53, %p54
      %p56 = scmp.ne.s32.totalorder %s48, %s51
      %p57 = scmp.eq.s32.totalorder %s12, 0
      %p58 = por %p56, %p57
      %p59 = scmp.ne.s32.totalorder %s48, %s51
      %p60 = scmp.eq.s32.totalorder %s17, 1
      %p61 = por %p59, %p60
      %p62 = scmp.ne.s32.totalorder %s51, %s52
      %p63 = scmp.eq.s32.totalorder %s17, 0
      %p64 = por %p62, %p63
      %p65 = scmp.ne.s32.totalorder %s51, %s52
      %p66 = scmp.eq.s32.totalorder %s18, 1
      %p67 = por %p65, %p66
      %p69 = scmp.ne.s32.totalorder %s52, %s68
      %p70 = scmp.eq.s32.totalorder %s18, 0
      %p71 = por %p69, %p70
      %s73 = sadd.s32 %s72, 1
      %p76 = scmp.eq.s32.totalorder %s12, 1
      %p77 = scmp.ne.s32.totalorder %s72, %s74
      %p78 = scmp.eq.s32.totalorder %s12, 0
      %p79 = por %p77, %p78
      %p80 = scmp.ne.s32.totalorder %s72, %s74
      %p81 = scmp.eq.s32.totalorder %s17, 1
      %p82 = por %p80, %p81
      %p83 = scmp.ne.s32.totalorder %s74, %s75
      %p84 = scmp.eq.s32.totalorder %s17, 0
      %p85 = por %p83, %p84
      %p86 = scmp.ne.s32.totalorder %s74, %s75
      %p87 = scmp.eq.s32.totalorder %s18, 1
      %p88 = por %p86, %p87
      %p90 = scmp.ne.s32.totalorder %s75, %s89
      %p91 = scmp.eq.s32.totalorder %s18, 0
      %p92 = por %p90, %p91
      %s93 = ssub.s32 %s12, %s19
      %p94 = scmp.eq.s32.totalorder %s93, 0
      %s96 = sadd.s32 %s95, 1
      %s97 = scalar_select %p94, %s95, %s96
      %p100 = pneg %p94
      %p101 = scmp.eq.s32.totalorder %s12, 1
      %p102 = por %p100, %p101
      %p103 = scmp.ne.s32.totalorder %s95, %s98
      %p104 = scmp.eq.s32.totalorder %s12, 0
      %p105 = por %p103, %p104
      %p106 = scmp.ne.s32.totalorder %s95, %s98
      %p107 = scmp.eq.s32.totalorder %s17, 1
      %p108 = por %p106, %p107
      %p109 = scmp.ne.s32.totalorder %s98, %s99
      %p110 = scmp.eq.s32.totalorder %s17, 0
      %p111 = por %p109, %p110
      %p112 = scmp.ne.s32.totalorder %s98, %s99
      %p113 = scmp.eq.s32.totalorder %s18, 1
      %p114 = por %p112, %p113
      %p116 = scmp.ne.s32.totalorder %s99, %s115
      %p117 = scmp.eq.s32.totalorder %s18, 0
      %p118 = por %p116, %p117
      %p119 = scmp.le.s32.totalorder 1, %s12
      %p120 = scmp.lt.s32.totalorder %s12, 3
      %p121 = pnand %p119, %p120
      %p122 = pneg %p121
      // Predicated region
      $region9: #{tpu_custom_call.1} parent=5 // pred_check
        _
      $region10: #{tpu_custom_call.1} parent=5 // pred_check_branch
        %124 = sbr.rel (%p121) target = $region12
      $region11: #{tpu_custom_call.1} parent=5 // pred_region
        %s125 = ssub.s32 %s12, 1
        // Predicated region
        $region13: #{tpu_custom_call.1} parent=11 // pred_check
          %p126 = pneg %p85
        $region14: #{tpu_custom_call.1} parent=11 // pred_check_branch
          %128 = sbr.rel (%p126) target = $region16
        $region15: #{tpu_custom_call.1} parent=11 // pred_region
          _
        $region16: #{tpu_custom_call.1} parent=11 // pred_fallthru
          _
      $region12: #{tpu_custom_call.1} parent=5 // pred_fallthru
        _
      %p129 = scmp.lt.s32.totalorder %s12, 2
      // Predicated region
      $region17: #{tpu_custom_call.1} parent=5 // pred_check
        %p130 = pneg %p129
      $region18: #{tpu_custom_call.1} parent=5 // pred_check_branch
        %132 = sbr.rel (%p130) target = $region20
      $region19: #{tpu_custom_call.1} parent=5 // pred_region
        // Predicated region
        $region21: #{tpu_custom_call.1} parent=19 // pred_check
          %p133 = pneg %p32
        $region22: #{tpu_custom_call.1} parent=19 // pred_check_branch
          %135 = sbr.rel (%p133) target = $region24
        $region23: #{tpu_custom_call.1} parent=19 // pred_region
          %s136 = sand.u32 %s22, 1
          %s137 = sand.u32 %s22, 1
          %s138 = smul.addr %s137, 32
          %s139 = scalar_lea.vmem [#allocation2], %s138
          %s140 = smul.u32 4, %s12
          %s141 = smul.addr %s140, 4
          %s142 = scalar_lea.vmem %s0, %s141
          // Predicated region
          $region25: #{tpu_custom_call.1} parent=23 // pred_check
            _
          $region26: #{tpu_custom_call.1} parent=23 // pred_check_branch
            %144 = sbr.rel (0) target = $region28
          $region27: #{tpu_custom_call.1} parent=23 // pred_region
            // Predicated region
            $region29: #{tpu_custom_call.1} parent=27 // pred_check
              _
            $region30: #{tpu_custom_call.1} parent=27 // pred_check_branch
              %146 = sbr.rel (0) target = $region32
            $region31: #{tpu_custom_call.1} parent=27 // pred_region
              loop: start=0, step=1, limit=1
              $region33: #{tpu_custom_call.1} parent=31 // loop_pre_header
                _
              $region34: #{tpu_custom_call.1} parent=31 // loop_header
                %s148 = sphi 0, %s152
                %p149 = scmp.ge.s32.totalorder %s148, 1
                %s153 = sphi %s142, %s142
                %s154 = sphi %s139, %s139
              $region35: #{tpu_custom_call.1} parent=31 // loop_header_branch
                %151 = sbr.rel (%p149) target = $region39
              $region36: #{tpu_custom_call.1} parent=31 // loop_body
                %v155 = vld [vmem:[%s153] sm:$0xff]
                %156 = vst [vmem:[%s154] sm:$0xff] %v155
                %v157 = vld [vmem:[%s153 + $0x8] sm:$0xff]
                %158 = vst [vmem:[%s154 + $0x8] sm:$0xff] %v157
                %v159 = vld [vmem:[%s153 + $0x20] sm:$0xff]
                %160 = vst [vmem:[%s154 + $0x10] sm:$0xff] %v159
                %v161 = vld [vmem:[%s153 + $0x28] sm:$0xff]
                %162 = vst [vmem:[%s154 + $0x18] sm:$0xff] %v161
              $region37: #{tpu_custom_call.1} parent=31 // loop_footer
                %s152 = sadd.s32 1, %s148
              $region38: #{tpu_custom_call.1} parent=31 // loop_footer_branch
                %147 = sbr.rel target = $region34
              $region39: #{tpu_custom_call.1} parent=31 // loop_exit
                _
            $region32: #{tpu_custom_call.1} parent=27 // pred_fallthru
              _
            // Predicated region
            $region40: #{tpu_custom_call.1} parent=27 // pred_check
              _
            $region41: #{tpu_custom_call.1} parent=27 // pred_check_branch
              %164 = sbr.rel target = $region43
            $region42: #{tpu_custom_call.1} parent=27 // pred_region
              _
            $region43: #{tpu_custom_call.1} parent=27 // pred_fallthru
              _
          $region28: #{tpu_custom_call.1} parent=23 // pred_fallthru
            _
          %165 = vnop
        $region24: #{tpu_custom_call.1} parent=19 // pred_fallthru
          _
        // Predicated region
        $region44: #{tpu_custom_call.1} parent=19 // pred_check
          %p166 = pneg %p58
        $region45: #{tpu_custom_call.1} parent=19 // pred_check_branch
          %168 = sbr.rel (%p166) target = $region47
        $region46: #{tpu_custom_call.1} parent=19 // pred_region
          %s169 = sand.u32 %s48, 1
          %s170 = sand.u32 %s48, 1
          %s171 = smul.addr %s170, 16
          %s172 = scalar_lea.vmem [#allocation3], %s171
          %s173 = smul.u32 4, %s12
          %s174 = smul.addr %s173, 2
          %s175 = scalar_lea.vmem %s1, %s174
          // Predicated region
          $region48: #{tpu_custom_call.1} parent=46 // pred_check
            _
          $region49: #{tpu_custom_call.1} parent=46 // pred_check_branch
            %177 = sbr.rel (0) target = $region51
          $region50: #{tpu_custom_call.1} parent=46 // pred_region
            // Predicated region
            $region52: #{tpu_custom_call.1} parent=50 // pred_check
              _
            $region53: #{tpu_custom_call.1} parent=50 // pred_check_branch
              %179 = sbr.rel (0) target = $region55
            $region54: #{tpu_custom_call.1} parent=50 // pred_region
              // Predicated region
              $region67: #{tpu_custom_call.1} parent=54 // pred_check
                _
              $region68: #{tpu_custom_call.1} parent=54 // pred_check_branch
                %197 = sbr.rel (0) target = $region70
              $region69: #{tpu_custom_call.1} parent=54 // pred_region
                loop: start=0, step=1, limit=1
                $region71: #{tpu_custom_call.1} parent=69 // loop_pre_header
                  _
                $region72: #{tpu_custom_call.1} parent=69 // loop_header
                  %s199 = sphi 0, %s203
                  %p200 = scmp.ge.s32.totalorder %s199, 1
                  %s204 = sphi %s175, %s175
                  %s205 = sphi %s172, %s172
                $region73: #{tpu_custom_call.1} parent=69 // loop_header_branch
                  %202 = sbr.rel (%p200) target = $region77
                $region74: #{tpu_custom_call.1} parent=69 // loop_body
                  %v206 = vld [vmem:[%s204] sm:$0xff]
                  %207 = vst [vmem:[%s205] sm:$0xff] %v206
                  %v208 = vld [vmem:[%s204 + $0x10] sm:$0xff]
                  %209 = vst [vmem:[%s205 + $0x8] sm:$0xff] %v208
                $region75: #{tpu_custom_call.1} parent=69 // loop_footer
                  %s203 = sadd.s32 1, %s199
                $region76: #{tpu_custom_call.1} parent=69 // loop_footer_branch
                  %198 = sbr.rel target = $region72
                $region77: #{tpu_custom_call.1} parent=69 // loop_exit
                  _
              $region70: #{tpu_custom_call.1} parent=54 // pred_fallthru
                _
              // Predicated region
              $region78: #{tpu_custom_call.1} parent=54 // pred_check
                _
              $region79: #{tpu_custom_call.1} parent=54 // pred_check_branch
                %211 = sbr.rel target = $region81
              $region80: #{tpu_custom_call.1} parent=54 // pred_region
                _
              $region81: #{tpu_custom_call.1} parent=54 // pred_fallthru
                _
            $region55: #{tpu_custom_call.1} parent=50 // pred_fallthru
              _
            // Predicated region
            $region56: #{tpu_custom_call.1} parent=50 // pred_check
              _
            $region57: #{tpu_custom_call.1} parent=50 // pred_check_branch
              %181 = sbr.rel target = $region59
            $region58: #{tpu_custom_call.1} parent=50 // pred_region
              %s183 = ssub.s32 256, 1
              loop: start=0, step=1, limit=1
              $region60: #{tpu_custom_call.1} parent=58 // loop_pre_header
                _
              $region61: #{tpu_custom_call.1} parent=58 // loop_header
                %s185 = sphi 0, %s189
                %p186 = scmp.ge.s32.totalorder %s185, 1
                %s190 = sphi %s175, %s175
                %s191 = sphi %s172, %s172
              $region62: #{tpu_custom_call.1} parent=58 // loop_header_branch
                %188 = sbr.rel (%p186) target = $region66
              $region63: #{tpu_custom_call.1} parent=58 // loop_body
                %v192 = vld [vmem:[%s190] sm:%s183]
                %193 = vst [vmem:[%s191] sm:%s183] %v192
                %v194 = vld [vmem:[%s190 + $0x10] sm:%s183]
                %195 = vst [vmem:[%s191 + $0x8] sm:%s183] %v194
              $region64: #{tpu_custom_call.1} parent=58 // loop_footer
                %s189 = sadd.s32 1, %s185
              $region65: #{tpu_custom_call.1} parent=58 // loop_footer_branch
                %184 = sbr.rel target = $region61
              $region66: #{tpu_custom_call.1} parent=58 // loop_exit
                _
            $region59: #{tpu_custom_call.1} parent=50 // pred_fallthru
              _
          $region51: #{tpu_custom_call.1} parent=46 // pred_fallthru
            _
          %212 = vnop
        $region47: #{tpu_custom_call.1} parent=19 // pred_fallthru
          _
      $region20: #{tpu_custom_call.1} parent=5 // pred_fallthru
        _
      %p213 = scmp.le.s32.totalorder 1, %s12
      %p214 = scmp.lt.s32.totalorder %s12, 3
      %p215 = pnand %p213, %p214
      %p216 = pneg %p215
      // Predicated region
      $region82: #{tpu_custom_call.1} parent=5 // pred_check
        _
      $region83: #{tpu_custom_call.1} parent=5 // pred_check_branch
        %218 = sbr.rel (%p215) target = $region85
      $region84: #{tpu_custom_call.1} parent=5 // pred_region
        %s219 = ssub.s32 %s12, 1
        %s220 = sand.u32 %s25, 1
        %s221 = sand.u32 %s25, 1
        %s222 = smul.addr %s221, 32
        %s223 = scalar_lea.vmem [#allocation2], %s222
        // Predicated region
        $region86: #{tpu_custom_call.1} parent=84 // pred_check
          %p224 = pneg %p38
        $region87: #{tpu_custom_call.1} parent=84 // pred_check_branch
          %226 = sbr.rel (%p224) target = $region89
        $region88: #{tpu_custom_call.1} parent=84 // pred_region
          _
        $region89: #{tpu_custom_call.1} parent=84 // pred_fallthru
          _
        %s227 = sand.u32 %s51, 1
        %s228 = sand.u32 %s51, 1
        %s229 = smul.addr %s228, 16
        %s230 = scalar_lea.vmem [#allocation3], %s229
        // Predicated region
        $region90: #{tpu_custom_call.1} parent=84 // pred_check
          %p231 = pneg %p64
        $region91: #{tpu_custom_call.1} parent=84 // pred_check_branch
          %233 = sbr.rel (%p231) target = $region93
        $region92: #{tpu_custom_call.1} parent=84 // pred_region
          _
        $region93: #{tpu_custom_call.1} parent=84 // pred_fallthru
          _
        %s234 = sand.u32 %s25, 1
        %s235 = sand.u32 %s25, 1
        %s236 = smul.addr %s235, 32
        %s237 = scalar_lea.vmem [#allocation2], %s236
        %p238 = pneg %p38
        %p239 = pneg %p35
        %s240 = sand.u32 %s51, 1
        %s241 = sand.u32 %s51, 1
        %s242 = smul.addr %s241, 16
        %s243 = scalar_lea.vmem [#allocation3], %s242
        %p244 = pneg %p64
        %p245 = pneg %p61
        %p246 = pneg %p85
        %p247 = pneg %p82
        %p248 = pneg %p111
        %p249 = pneg %p108
        %s250 = sand.u32 %s98, 1
        %s251 = scalar_lea.sflag [#allocation5], %s250
        %s252 = sand.u32 %s98, 1
        %s253 = smul.addr %s252, 8
        %s254 = scalar_lea.vmem [#allocation4], %s253
        %s255 = smul.u32 4, %s17
        %s256 = smul.u32 4, %s17
        %s257 = smul.u32 4, %s17
        %v258 = vld [vmem:[%s223] sm:$0x77]
        %v259 = vld [vmem:[%s223 + $0x8] sm:$0x77]
        %v260 = vld [vmem:[%s223 + $0x10] sm:$0x77]
        %v261 = vld [vmem:[%s223 + $0x18] sm:$0x77]
        %v262 = vld [vmem:[%s230] sm:$0xff]
        %v263 = vld [vmem:[%s230 + $0x8] sm:$0xff]
        %v264 = vld [vmem:[%s2] sm:$0x3]
        %v265 = vmul.f32 %v258, %v258
        %v266 = vmul.f32 %v259, %v259
        %v267 = vmul.f32 %v260, %v260
        %v268 = vmul.f32 %v261, %v261
        %v273 = vrot.slane %v265, 5
        %v274 = vrot.slane %v273, 4
        %v275 = vrot.slane %v266, 5
        %v276 = vrot.slane %v275, 4
        %v277 = vrot.slane %v267, 5
        %v278 = vrot.slane %v277, 4
        %v279 = vrot.slane %v268, 5
        %v280 = vrot.slane %v279, 4
        %v285 = vadd.f32 %v265, %v274
        %v286 = vadd.f32 %v266, %v276
        %v287 = vadd.f32 %v267, %v278
        %v288 = vadd.f32 %v268, %v280
        %v289 = vrot.slane %v265, 6
        %v290 = vrot.slane %v289, 4
        %v291 = vrot.slane %v266, 6
        %v292 = vrot.slane %v291, 4
        %v293 = vrot.slane %v267, 6
        %v294 = vrot.slane %v293, 4
        %v295 = vrot.slane %v268, 6
        %v296 = vrot.slane %v295, 4
        %v301 = vadd.f32 %v285, %v290
        %v302 = vadd.f32 %v286, %v292
        %v303 = vadd.f32 %v287, %v294
        %v304 = vadd.f32 %v288, %v296
        %v305 = vmul.f32 %v262, %v262
        %v306 = vmul.f32 %v263, %v263
        %v307 = vmul.f32 %v305, 65536.0
        %v308 = vmul.f32 %v306, 65536.0
        %v309 = vmul.f32 %v305, 36864.0
        %v310 = vmul.f32 %v306, 36864.0
        %v313 = vrot.slane %v309, 7
        %v314 = vrot.slane %v313, 2
        %v315 = vrot.slane %v310, 7
        %v316 = vrot.slane %v315, 2
        %v319 = vadd.f32 %v307, %v314
        %v320 = vadd.f32 %v308, %v316
        %322 = vset.pattern.permute.xlu0 0
        %323 = vperm.xlu0 %322, %v264
        %v324 = vpop.permute.xlu0 %323
        %v326 = vunpack.c.l.s4 269488144
        %v327 = vunpack.c.0.s8 %v326
        %v328 = vperm.slane %v324, %v327
        %v329 = vrot.slane %v328, 1
        %v332 = vadd.f32 %v319, %v328
        %v333 = vadd.f32 %v320, %v329
        %v337 = vunpack.c.l.s4 572653568
        %v338 = vunpack.c.0.s8 %v337
        %v339 = vperm.slane %v332, %v338
        %v341 = vunpack.c.l.s4 1717978180
        %v342 = vunpack.c.0.s8 %v341
        %v343 = vperm.slane %v332, %v342
        %v345 = vunpack.c.l.s4 572653568
        %v346 = vunpack.c.0.s8 %v345
        %v347 = vperm.slane %v333, %v346
        %v349 = vunpack.c.l.s4 1717978180
        %v350 = vunpack.c.0.s8 %v349
        %v351 = vperm.slane %v333, %v350
        %v356 = vrcp.pop %v339
        %v357 = vmul.f32 %v339, %v356
        %v358 = vsub.f32 1.0, %v357
        %v359 = vmul.f32 %v356, %v358
        %v360 = vadd.f32 %v356, %v359
        %vm361 = vweird.f32 %v339
        %vm362 = vweird.f32 %v356
        %vm363 = vmor %vm361, %vm362
        %v364 = vsel %vm363, %v356, %v360
        %v365 = vand.u32 2147483647, %v339
        %vm366 = vcmp.eq.f32.partialorder %v365, 8.507059e+37
        %v367 = vand.u32 %v339, 2147483648
        %v368 = vor.u32 1.1754944e-38, %v367
        %v369 = vsel %vm366, %v368, %v364
        %v370 = vmul.f32 %v301, %v369
        %v371 = vrcp.pop %v343
        %v372 = vmul.f32 %v343, %v371
        %v373 = vsub.f32 1.0, %v372
        %v374 = vmul.f32 %v371, %v373
        %v375 = vadd.f32 %v371, %v374
        %vm376 = vweird.f32 %v343
        %vm377 = vweird.f32 %v371
        %vm378 = vmor %vm376, %vm377
        %v379 = vsel %vm378, %v371, %v375
        %v380 = vand.u32 2147483647, %v343
        %vm381 = vcmp.eq.f32.partialorder %v380, 8.507059e+37
        %v382 = vand.u32 %v343, 2147483648
        %v383 = vor.u32 1.1754944e-38, %v382
        %v384 = vsel %vm381, %v383, %v379
        %v385 = vmul.f32 %v302, %v384
        %v386 = vrcp.pop %v347
        %v387 = vmul.f32 %v347, %v386
        %v388 = vsub.f32 1.0, %v387
        %v389 = vmul.f32 %v386, %v388
        %v390 = vadd.f32 %v386, %v389
        %vm391 = vweird.f32 %v347
        %vm392 = vweird.f32 %v386
        %vm393 = vmor %vm391, %vm392
        %v394 = vsel %vm393, %v386, %v390
        %v395 = vand.u32 2147483647, %v347
        %vm396 = vcmp.eq.f32.partialorder %v395, 8.507059e+37
        %v397 = vand.u32 %v347, 2147483648
        %v398 = vor.u32 1.1754944e-38, %v397
        %v399 = vsel %vm396, %v398, %v394
        %v400 = vmul.f32 %v303, %v399
        %v401 = vrcp.pop %v351
        %v402 = vmul.f32 %v351, %v401
        %v403 = vsub.f32 1.0, %v402
        %v404 = vmul.f32 %v401, %v403
        %v405 = vadd.f32 %v401, %v404
        %vm406 = vweird.f32 %v351
        %vm407 = vweird.f32 %v401
        %vm408 = vmor %vm406, %vm407
        %v409 = vsel %vm408, %v401, %v405
        %v410 = vand.u32 2147483647, %v351
        %vm411 = vcmp.eq.f32.partialorder %v410, 8.507059e+37
        %v412 = vand.u32 %v351, 2147483648
        %v413 = vor.u32 1.1754944e-38, %v412
        %v414 = vsel %vm411, %v413, %v409
        %v415 = vmul.f32 %v304, %v414
        %v416 = vrsqrt.pop %v370
        %v417 = vmul.f32 %v416, %v370
        %v418 = vmul.f32 %v417, %v416
        %v419 = vmul.f32 0.5, %v418
        %v420 = vsub.f32 1.5, %v419
        %v421 = vmul.f32 %v416, %v420
        %v422 = vmul.f32 %v370, %v421
        %vm423 = vcmp.eq.f32.partialorder %v370, inf
        %v424 = vsel %vm423, %v370, %v422
        %vm425 = vcmp.eq.f32.partialorder %v370, 0.0
        %v426 = vand.u32 %v370, 2147483648
        %v427 = vsel %vm425, %v426, %v424
        %v428 = vrsqrt.pop %v385
        %v429 = vmul.f32 %v428, %v385
        %v430 = vmul.f32 %v429, %v428
        %v431 = vmul.f32 0.5, %v430
        %v432 = vsub.f32 1.5, %v431
        %v433 = vmul.f32 %v428, %v432
        %v434 = vmul.f32 %v385, %v433
        %vm435 = vcmp.eq.f32.partialorder %v385, inf
        %v436 = vsel %vm435, %v385, %v434
        %vm437 = vcmp.eq.f32.partialorder %v385, 0.0
        %v438 = vand.u32 %v385, 2147483648
        %v439 = vsel %vm437, %v438, %v436
        %v440 = vrsqrt.pop %v400
        %v441 = vmul.f32 %v440, %v400
        %v442 = vmul.f32 %v441, %v440
        %v443 = vmul.f32 0.5, %v442
        %v444 = vsub.f32 1.5, %v443
        %v445 = vmul.f32 %v440, %v444
        %v446 = vmul.f32 %v400, %v445
        %vm447 = vcmp.eq.f32.partialorder %v400, inf
        %v448 = vsel %vm447, %v400, %v446
        %vm449 = vcmp.eq.f32.partialorder %v400, 0.0
        %v450 = vand.u32 %v400, 2147483648
        %v451 = vsel %vm449, %v450, %v448
        %v452 = vrsqrt.pop %v415
        %v453 = vmul.f32 %v452, %v415
        %v454 = vmul.f32 %v453, %v452
        %v455 = vmul.f32 0.5, %v454
        %v456 = vsub.f32 1.5, %v455
        %v457 = vmul.f32 %v452, %v456
        %v458 = vmul.f32 %v415, %v457
        %vm459 = vcmp.eq.f32.partialorder %v415, inf
        %v460 = vsel %vm459, %v415, %v458
        %vm461 = vcmp.eq.f32.partialorder %v415, 0.0
        %v462 = vand.u32 %v415, 2147483648
        %v463 = vsel %vm461, %v462, %v460
        %v468 = vrot.slane %v427, 2
        %v469 = vrot.slane %v439, 4
        %v470 = vrot.slane %v439, 6
        %v471 = vrot.slane %v451, 2
        %v472 = vrot.slane %v463, 4
        %v473 = vrot.slane %v463, 6
        %vm474 = vcmask 1041408
        %v475 = vsel %vm474, %v427, %v468
        %vm476 = vcmask 1045508
        %v477 = vsel %vm476, %v469, %v470
        %vm478 = vcmask 1043456
        %v479 = vsel %vm478, %v475, %v477
        %v480 = vsel %vm474, %v451, %v471
        %v481 = vsel %vm476, %v472, %v473
        %v482 = vsel %vm478, %v480, %v481
        %vm483 = vcmask 1044484
        %v484 = vsel %vm483, %v479, %v479
        %vm485 = vcmask 1046534
        %v486 = vsel %vm485, %v479, %v484
        %v487 = vrot.slane %v482, 7
        %vm488 = vcmask 1041409
        %v489 = vsel %vm488, %v487, %v486
        %vm490 = vcmask 1043459
        %v491 = vsel %vm490, %v487, %v489
        %vm492 = vcmask 1045509
        %v493 = vsel %vm492, %v487, %v491
        %vm494 = vcmask 1047559
        %v495 = vsel %vm494, %v487, %v493
        %497 = vst [vmem:[%s254] sm:$0xff] %v495
        %s498 = sand.u32 %s98, 1
        %s499 = scalar_lea.sflag [#allocation5], %s498
        %s500 = sand.u32 %s98, 1
        %s501 = smul.addr %s500, 8
        %s502 = scalar_lea.vmem [#allocation4], %s501
        // Predicated region
        $region94: #{tpu_custom_call.1} parent=84 // pred_check
          %p503 = pneg %p108
        $region95: #{tpu_custom_call.1} parent=84 // pred_check_branch
          %505 = sbr.rel (%p503) target = $region97
        $region96: #{tpu_custom_call.1} parent=84 // pred_region
          %s506 = smul.u32 4, %s17
          %508 = vsyncadd %s499, 0
          %s509 = smul.addr %s506, 2
          %s510 = scalar_lea.hbm %s3, %s509
          %s512 = sshll.u32 %s502, 4
          %s513 = int_to_ptr.vmem [resolvable:$true] %s512
          %s514 = sshll.u32 %s510, 4
          %s515 = int_to_ptr.hbm [resolvable:$true] %s514
          %517 = dma.vmem_to_hbm [thread:$0]  %s513, 128, %s515, %s499
        $region97: #{tpu_custom_call.1} parent=84 // pred_fallthru
          _
      $region85: #{tpu_custom_call.1} parent=5 // pred_fallthru
        _
      %p518 = scmp.le.s32.totalorder 2, %s12
      // Predicated region
      $region98: #{tpu_custom_call.1} parent=5 // pred_check
        %p519 = pneg %p518
      $region99: #{tpu_custom_call.1} parent=5 // pred_check_branch
        %521 = sbr.rel (%p519) target = $region101
      $region100: #{tpu_custom_call.1} parent=5 // pred_region
        %s522 = ssub.s32 %s12, 2
        // Predicated region
        $region102: #{tpu_custom_call.1} parent=100 // pred_check
          %p523 = pneg %p114
        $region103: #{tpu_custom_call.1} parent=100 // pred_check_branch
          %525 = sbr.rel (%p523) target = $region105
        $region104: #{tpu_custom_call.1} parent=100 // pred_region
          %s526 = sand.u32 %s99, 1
          %s527 = scalar_lea.sflag [#allocation5], %s526
          %s528 = sand.u32 %s99, 1
          %s529 = smul.addr %s528, 8
          %s530 = scalar_lea.vmem [#allocation4], %s529
          %532 = dma.done %s527, 128
        $region105: #{tpu_custom_call.1} parent=100 // pred_fallthru
          _
      $region101: #{tpu_custom_call.1} parent=5 // pred_fallthru
        _
    $region6: #{tpu_custom_call.1} parent=1 // loop_footer
      %s16 = sadd.s32 1, %s12
    $region7: #{tpu_custom_call.1} parent=1 // loop_footer_branch
      %11 = sbr.rel target = $region3
    $region8: #{tpu_custom_call.1} parent=1 // loop_exit
      _
    %533 = vsyncpa [#allocation5], 1
    %s534 = scalar_lea.sflag [#allocation5], 1
    %535 = vsyncpa %s534, 1

</llo_original>
